<compile_context>
chip_gen: v7x
topology: tpu7x:2x2x1
jax: 0.10.0
libtpu: 0.0.40
codegen_flags: <defaults>
</compile_context>

<pallas_src>
import functools

import jax
import jax.numpy as jnp
from jax import lax
from jax.experimental import pallas as pl
from jax.experimental.pallas import tpu as pltpu


def _round_up(x, m):
    return (x + m - 1) // m * m


def _vmem_limits():
    """Per-generation scoped-VMEM limit and per-step tile-working-set budget."""
    try:
        cap = int(pltpu.get_tpu_info().vmem_capacity_bytes)
    except Exception:  # conservative fallback (v7x-sized)
        cap = 64 * 1024 * 1024
    limit = min(cap * 3 // 4, 112 * 1024 * 1024)   # ~48MiB on v7x, ~96MiB on v5e/v6e
    budget = limit * 3 // 5
    return limit, budget


def _choose_hw_tile(hw, cin, n, cout, in_bytes, *, cap, budget):
    """Largest lane-dense (128-multiple) HW tile whose working set fits `budget`."""
    hw128 = _round_up(hw, 128)
    for mult in (64, 32, 16, 8, 4, 2, 1):
        thw = mult * 128
        if thw > cap or thw > hw128:
            continue
        # Phase A: double-buffered feat+coarse tiles + f32 y / masked copies.
        a_bytes = 2 * (cin + n) * thw * in_bytes + (cout * 4 + (cin + n) * in_bytes) * thw
        # Phase B: double-buffered coarse-in + out tiles + f32 intermediate.
        b_bytes = 2 * (n + cout) * thw * in_bytes + cout * thw * 4
        if max(a_bytes, b_bytes) <= budget:
            return thw
    return 128


def _energy_kernel(feat_ref, coarse_ref, w1_ref, shift_ref, energy_ref, acc_ref,
                   *, tiles_per_split, hw_total, thw, needs_mask):
    h = pl.program_id(2)

    @pl.when(h == 0)
    def _():
        acc_ref[...] = jnp.zeros_like(acc_ref)

    feat = feat_ref[...]      # (Cin, THW)
    coarse = coarse_ref[...]  # (N,  THW)

    if needs_mask:
        # Zero the lanes past HW (partial last block reads are undefined there).
        s = pl.program_id(1)
        start = (s * tiles_per_split + h) * thw
        lane = lax.broadcasted_iota(jnp.int32, (1, thw), 1)
        valid = (start + lane) < hw_total
        feat = jnp.where(valid, feat, 0)
        coarse = jnp.where(valid, coarse, 0)

    # conv1: 1x1 conv (no bias) with eval-mode BN scale folded into w1; + shift, ReLU.
    # TODO(synk): Dropout2d(0.2) and BatchNorm batch statistics are eval-mode only.
    y = jnp.dot(w1_ref[...], feat, preferred_element_type=jnp.float32)   # (Cout, THW)
    y = jnp.maximum(y + shift_ref[...], 0.0).astype(coarse.dtype)

    # energy[n, c] += sum_hw coarse[n, hw] * y[c, hw]  (contraction on the lane dim).
    acc_ref[...] += lax.dot_general(
        coarse, y, (((1,), (1,)), ((), ())), preferred_element_type=jnp.float32)

    @pl.when(h == pl.num_programs(2) - 1)
    def _():
        energy_ref[...] = acc_ref[...]


def _apply_kernel(fused_ref, coarse_ref, b2_ref, out_ref):
    # out[c, hw] = sum_n fused[c, n] * coarse[n, hw]   (attention-apply + conv2 folded)
    o = jnp.dot(fused_ref[...], coarse_ref[...], preferred_element_type=jnp.float32)
    out_ref[...] = (o + b2_ref[...]).astype(out_ref.dtype)


def acf_module(feat_ffm, coarse_x, params, *, compute_dtype=None, hw_tile_cap=8192):
    """feat_ffm: (B, Cin, H, W), coarse_x: (B, N, H, W) -> (B, Cout, H, W)."""
    B, Cin, H, W = feat_ffm.shape
    _, N, _, _ = coarse_x.shape
    HW = H * W
    Cout = params["w1"].shape[0]

    if compute_dtype is None:
        compute_dtype = feat_ffm.dtype
    compute_dtype = jnp.dtype(compute_dtype)
    in_bytes = compute_dtype.itemsize

    vmem_limit, tile_budget = _vmem_limits()
    thw = _choose_hw_tile(HW, Cin, N, Cout, in_bytes, cap=hw_tile_cap, budget=tile_budget)
    n_hw = -(-HW // thw)                              # lane tiles; last one may be ragged

    # Split the HW reduction into two parallel halves when B alone cannot keep both
    # TensorCores of a dual-core chip (v7x) busy; harmless on single-core chips.
    n_split = 2 if (B % 2 == 1 and n_hw >= 2) else 1
    tps = -(-n_hw // n_split)                         # tiles per split
    needs_mask = (n_split * tps * thw) != HW

    # Free (metadata-only) reshapes; astype is a no-op when dtypes already match.
    feat = feat_ffm.reshape(B, Cin, HW).astype(compute_dtype)
    coarse = coarse_x.reshape(B, N, HW).astype(compute_dtype)

    # Fold eval-mode BatchNorm scale into the conv1 weight (trace time, tiny).
    w1 = (params["bn_scale"][:, None] * params["w1"]).astype(compute_dtype)   # (Cout, Cin)
    shift = params["bn_shift"].reshape(Cout, 1).astype(jnp.float32)
    b2 = params["b2"].reshape(Cout, 1).astype(jnp.float32)

    def tile_idx(s, h):
        t = s * tps + h
        if n_split * tps > n_hw:      # clamp phantom tiles (fully masked in-kernel anyway)
            t = jnp.minimum(t, n_hw - 1)
        return t

    # ---- Phase A: partial energies over HW tiles -> (B, n_split, N, Cout) f32.
    kern_a = functools.partial(_energy_kernel, tiles_per_split=tps, hw_total=HW,
                               thw=thw, needs_mask=needs_mask)
    partial_energy = pl.pallas_call(
        kern_a,
        out_shape=jax.ShapeDtypeStruct((B, n_split, N, Cout), jnp.float32),
        grid_spec=pltpu.PrefetchScalarGridSpec(
            num_scalar_prefetch=0,
            grid=(B, n_split, tps),
            in_specs=[
                pl.BlockSpec((None, Cin, thw), lambda b, s, h: (b, 0, tile_idx(s, h))),
                pl.BlockSpec((None, N, thw), lambda b, s, h: (b, 0, tile_idx(s, h))),
                pl.BlockSpec((Cout, Cin), lambda b, s, h: (0, 0)),
                pl.BlockSpec((Cout, 1), lambda b, s, h: (0, 0)),
            ],
            out_specs=pl.BlockSpec((None, None, N, Cout), lambda b, s, h: (b, s, 0, 0)),
            scratch_shapes=[pltpu.VMEM((N, Cout), jnp.float32)],
        ),
        compiler_params=pltpu.CompilerParams(
            dimension_semantics=("parallel", "parallel", "arbitrary"),
            vmem_limit_bytes=vmem_limit),
        cost_estimate=pl.CostEstimate(
            flops=2 * B * HW * (Cout * Cin + N * Cout),
            transcendentals=0,
            bytes_accessed=B * HW * (Cin + N) * in_bytes + B * n_split * N * Cout * 4),
    )(feat, coarse, w1, shift)

    # ---- Tiny plain-JAX glue: combine splits, exact softmax, fold conv2 into attention.
    energy = partial_energy.sum(axis=1)                                  # (B, N, Cout)
    energy_new = jnp.max(energy, axis=-1, keepdims=True) - energy
    attn = jax.nn.softmax(energy_new, axis=-1)
    fused = jnp.einsum("oc,bnc->bon", params["w2"].astype(jnp.float32), attn,
                       precision=lax.Precision.HIGHEST)                  # (B, Cout, N)
    fused = fused.astype(compute_dtype)

    # ---- Phase B: out[b] = fused[b] @ coarse[b] + b2, streamed over HW tiles.
    out = pl.pallas_call(
        _apply_kernel,
        out_shape=jax.ShapeDtypeStruct((B, Cout, HW), compute_dtype),
        grid_spec=pltpu.PrefetchScalarGridSpec(
            num_scalar_prefetch=0,
            grid=(B, n_hw),
            in_specs=[
                pl.BlockSpec((None, Cout, N), lambda b, h: (b, 0, 0)),
                pl.BlockSpec((None, N, thw), lambda b, h: (b, 0, h)),
                pl.BlockSpec((Cout, 1), lambda b, h: (0, 0)),
            ],
            out_specs=pl.BlockSpec((None, Cout, thw), lambda b, h: (b, 0, h)),
        ),
        compiler_params=pltpu.CompilerParams(
            dimension_semantics=("parallel", "parallel"),
            vmem_limit_bytes=vmem_limit),
        cost_estimate=pl.CostEstimate(
            flops=2 * B * HW * Cout * N,
            transcendentals=0,
            bytes_accessed=B * HW * (N + Cout) * in_bytes + B * Cout * N * in_bytes),
    )(fused, coarse, b2)

    return out.reshape(B, Cout, H, W)


def acf_reference(feat_ffm, coarse_x, params):
    """Pure-JAX reference (highest precision) for correctness checks."""
    B, Cin, H, W = feat_ffm.shape
    _, N, _, _ = coarse_x.shape
    Cout = params["w1"].shape[0]
    hi = lax.Precision.HIGHEST
    feat = feat_ffm.reshape(B, Cin, H * W)
    y = jnp.einsum("oc,bcs->bos", params["w1"], feat, precision=hi)
    y = jnp.maximum(
        y * params["bn_scale"][None, :, None] + params["bn_shift"][None, :, None], 0.0)
    coarse = coarse_x.reshape(B, N, H * W)
    energy = jnp.einsum("bns,bcs->bnc", coarse, y, precision=hi)
    energy_new = jnp.max(energy, axis=-1, keepdims=True) - energy
    attn = jax.nn.softmax(energy_new, axis=-1)
    out = jnp.einsum("bnc,bns->bcs", attn, coarse, precision=hi)
    out = jnp.einsum("oc,bcs->bos", params["w2"], out, precision=hi)
    out = out + params["b2"][None, :, None]
    return out.reshape(B, Cout, H, W)


if __name__ == "__main__":
    Cin, Cout, N = 4, 8, 6
    key = jax.random.PRNGKey(0)
    k_feat, k_coarse, k_w1, k_w2 = jax.random.split(key, 4)

    # kaiming_normal_(a=1): gain = sqrt(2/(1+1)) = 1, std = 1/sqrt(fan_in) (1x1 conv)
    params = {
        "w1": jax.random.normal(k_w1, (Cout, Cin), jnp.float32) / jnp.sqrt(Cin),
        # BatchNorm2d eval: gamma=1, beta=0, running_mean=0, running_var=1, eps=1e-5
        "bn_scale": jnp.ones((Cout,), jnp.float32) / jnp.sqrt(1.0 + 1e-5),
        "bn_shift": jnp.zeros((Cout,), jnp.float32),
        "w2": jax.random.normal(k_w2, (Cout, Cout), jnp.float32) / jnp.sqrt(Cout),
        "b2": jnp.zeros((Cout,), jnp.float32),
    }

    # Config 1: even batch, HW an exact multiple of the lane tile (clean fast path).
    B, H, W = 2, 16, 16
    feat = jax.random.normal(k_feat, (B, Cin, H, W), jnp.float32)
    coarse = jax.random.normal(k_coarse, (B, N, H, W), jnp.float32)
    out = jax.block_until_ready(acf_module(feat, coarse, params))
    ref = acf_reference(feat, coarse, params)
    assert out.shape == (B, Cout, H, W)
    assert jnp.allclose(out, ref, atol=1e-3, rtol=1e-3), "mismatch (even B, aligned HW)"

    # Config 2: odd batch + ragged HW tail -> exercises the in-kernel lane mask
    # and the dual-TensorCore HW split of phase A.
    B2, H2, W2 = 1, 16, 20
    feat2 = jax.random.normal(k_feat, (B2, Cin, H2, W2), jnp.float32)
    coarse2 = jax.random.normal(k_coarse, (B2, N, H2, W2), jnp.float32)
    out2 = jax.block_until_ready(acf_module(feat2, coarse2, params))
    ref2 = acf_reference(feat2, coarse2, params)
    assert out2.shape == (B2, Cout, H2, W2)
    assert jnp.allclose(out2, ref2, atol=1e-3, rtol=1e-3), "mismatch (odd B, ragged HW)"

    # bf16 I/O smoke test (the memory-bound roofline win at real shapes).
    out_bf16 = jax.block_until_ready(
        acf_module(feat.astype(jnp.bfloat16), coarse.astype(jnp.bfloat16),
                   params, compute_dtype=jnp.bfloat16))
    assert out_bf16.shape == (B, Cout, H, W)
    assert bool(jnp.all(jnp.isfinite(out_bf16.astype(jnp.float32))))

    print("KERNEL_OK")
</pallas_src>

<mosaic_0001>
module attributes {stable_mosaic.version = 11 : i64} {
  func.func @_energy_kernel(%arg0: i32, %arg1: i32, %arg2: i32, %arg3: memref<1x4x256xf32, #tpu.memory_space<vmem>>, %arg4: memref<1x6x256xf32, #tpu.memory_space<vmem>>, %arg5: memref<8x4xf32, #tpu.memory_space<vmem>>, %arg6: memref<8x1xf32, #tpu.memory_space<vmem>>, %arg7: memref<1x1x6x8xf32, #tpu.memory_space<vmem>>, %arg8: memref<6x8xf32, #tpu.memory_space<vmem>>) attributes {dimension_semantics = [#tpu.dimension_semantics<parallel>, #tpu.dimension_semantics<parallel>, #tpu.dimension_semantics<arbitrary>], iteration_bounds = array<i64: 2, 1, 1>, scalar_prefetch = 0 : i64, scratch_operands = 1 : i64, tpu.core_type = #tpu.core_type<tc>, window_params = [{transform_indices = @transform_0, window_bounds = array<i64: 1, 4, 256>}, {transform_indices = @transform_1, window_bounds = array<i64: 1, 6, 256>}, {pipeline_mode = #tpu.pipeline_mode<synchronous>, transform_indices = @transform_2, window_bounds = array<i64: 8, 4>}, {pipeline_mode = #tpu.pipeline_mode<synchronous>, transform_indices = @transform_3, window_bounds = array<i64: 8, 1>}, {transform_indices = @transform_4, window_bounds = array<i64: 1, 1, 6, 8>}]} {
    %c0_i32 = arith.constant 0 : i32
    %0 = arith.cmpi eq, %arg2, %c0_i32 : i32
    %1 = arith.extui %0 : i1 to i32
    %c0_i32_0 = arith.constant 0 : i32
    %2 = arith.cmpi ne, %1, %c0_i32_0 : i32
    scf.if %2 {
      %cst_18 = arith.constant 0.000000e+00 : f32
      %21 = vector.broadcast %cst_18 : f32 to vector<6x8xf32>
      %c0_19 = arith.constant 0 : index
      %c0_20 = arith.constant 0 : index
      %22 = vector.load %arg8[%c0_19, %c0_20] : memref<6x8xf32, #tpu.memory_space<vmem>>, vector<6x8xf32>
      tpu.vector_store %arg8[%c0_19, %c0_20], %21 {strides = array<i32>} : memref<6x8xf32, #tpu.memory_space<vmem>>, vector<6x8xf32>,
    } else {
    }
    %c0 = arith.constant 0 : index
    %c0_1 = arith.constant 0 : index
    %c0_2 = arith.constant 0 : index
    %3 = vector.load %arg3[%c0, %c0_1, %c0_2] : memref<1x4x256xf32, #tpu.memory_space<vmem>>, vector<1x4x256xf32>
    %4 = vector.shape_cast %3 : vector<1x4x256xf32> to vector<4x256xf32>
    %c0_3 = arith.constant 0 : index
    %c0_4 = arith.constant 0 : index
    %c0_5 = arith.constant 0 : index
    %5 = vector.load %arg4[%c0_3, %c0_4, %c0_5] : memref<1x6x256xf32, #tpu.memory_space<vmem>>, vector<1x6x256xf32>
    %6 = vector.shape_cast %5 : vector<1x6x256xf32> to vector<6x256xf32>
    %c0_6 = arith.constant 0 : index
    %c0_7 = arith.constant 0 : index
    %7 = vector.load %arg5[%c0_6, %c0_7] : memref<8x4xf32, #tpu.memory_space<vmem>>, vector<8x4xf32>
    %cst = arith.constant dense<0.000000e+00> : vector<8x256xf32>
    %8 = tpu.matmul %7, %4, %cst {dimension_numbers = #tpu.dot_dimension_numbers<[1], [0], [0], [1], [0, 0, 1, 1], [], []>} : vector<8x4xf32>, vector<4x256xf32>, vector<8x256xf32> -> vector<8x256xf32>
    %c0_8 = arith.constant 0 : index
    %c0_9 = arith.constant 0 : index
    %9 = vector.load %arg6[%c0_8, %c0_9] : memref<8x1xf32, #tpu.memory_space<vmem>>, vector<8x1xf32>
    %10 = vector.broadcast %9 : vector<8x1xf32> to vector<8x256xf32>
    %11 = arith.addf %8, %10 : vector<8x256xf32>
    %cst_10 = arith.constant 0.000000e+00 : f32
    %12 = vector.broadcast %cst_10 : f32 to vector<8x256xf32>
    %13 = arith.maximumf %11, %12 : vector<8x256xf32>
    %c0_11 = arith.constant 0 : index
    %c0_12 = arith.constant 0 : index
    %14 = vector.load %arg8[%c0_11, %c0_12] : memref<6x8xf32, #tpu.memory_space<vmem>>, vector<6x8xf32>
    %cst_13 = arith.constant dense<0.000000e+00> : vector<6x8xf32>
    %15 = tpu.matmul %6, %13, %cst_13 {dimension_numbers = #tpu.dot_dimension_numbers<[1], [1], [0], [0], [0, 0, 1, 0], [], []>} : vector<6x256xf32>, vector<8x256xf32>, vector<6x8xf32> -> vector<6x8xf32>
    %16 = arith.addf %14, %15 : vector<6x8xf32>
    %c0_14 = arith.constant 0 : index
    %c0_15 = arith.constant 0 : index
    %17 = vector.load %arg8[%c0_14, %c0_15] : memref<6x8xf32, #tpu.memory_space<vmem>>, vector<6x8xf32>
    tpu.vector_store %arg8[%c0_14, %c0_15], %16 {strides = array<i32>} : memref<6x8xf32, #tpu.memory_space<vmem>>, vector<6x8xf32>,
    %c0_i32_16 = arith.constant 0 : i32
    %18 = arith.cmpi eq, %arg2, %c0_i32_16 : i32
    %19 = arith.extui %18 : i1 to i32
    %c0_i32_17 = arith.constant 0 : i32
    %20 = arith.cmpi ne, %19, %c0_i32_17 : i32
    scf.if %20 {
      %c0_18 = arith.constant 0 : index
      %c0_19 = arith.constant 0 : index
      %21 = vector.load %arg8[%c0_18, %c0_19] : memref<6x8xf32, #tpu.memory_space<vmem>>, vector<6x8xf32>
      %c0_20 = arith.constant 0 : index
      %c0_21 = arith.constant 0 : index
      %c0_22 = arith.constant 0 : index
      %c0_23 = arith.constant 0 : index
      %22 = vector.load %arg7[%c0_20, %c0_21, %c0_22, %c0_23] : memref<1x1x6x8xf32, #tpu.memory_space<vmem>>, vector<1x1x6x8xf32>
      %23 = vector.shape_cast %22 : vector<1x1x6x8xf32> to vector<6x8xf32>
      %24 = vector.shape_cast %21 : vector<6x8xf32> to vector<1x1x6x8xf32>
      tpu.vector_store %arg7[%c0_20, %c0_21, %c0_22, %c0_23], %24 {strides = array<i32>} : memref<1x1x6x8xf32, #tpu.memory_space<vmem>>, vector<1x1x6x8xf32>,
    } else {
    }
    return
  }
  func.func @transform_0(%arg0: i32, %arg1: i32, %arg2: i32) -> (i32, i32, i32) {
    %c1_i32 = arith.constant 1 : i32
    %0 = arith.muli %arg1, %c1_i32 : i32
    %1 = arith.addi %0, %arg2 : i32
    %c0_i32 = arith.constant 0 : i32
    %c0_i32_0 = arith.constant 0 : i32
    return %arg0, %c0_i32, %1 : i32, i32, i32
  }
  func.func @transform_1(%arg0: i32, %arg1: i32, %arg2: i32) -> (i32, i32, i32) {
    %c1_i32 = arith.constant 1 : i32
    %0 = arith.muli %arg1, %c1_i32 : i32
    %1 = arith.addi %0, %arg2 : i32
    %c0_i32 = arith.constant 0 : i32
    %c0_i32_0 = arith.constant 0 : i32
    return %arg0, %c0_i32, %1 : i32, i32, i32
  }
  func.func @transform_2(%arg0: i32, %arg1: i32, %arg2: i32) -> (i32, i32) {
    %c0_i32 = arith.constant 0 : i32
    %c0_i32_0 = arith.constant 0 : i32
    %c0_i32_1 = arith.constant 0 : i32
    return %c0_i32, %c0_i32_0 : i32, i32
  }
  func.func @transform_3(%arg0: i32, %arg1: i32, %arg2: i32) -> (i32, i32) {
    %c0_i32 = arith.constant 0 : i32
    %c0_i32_0 = arith.constant 0 : i32
    %c0_i32_1 = arith.constant 0 : i32
    return %c0_i32, %c0_i32_0 : i32, i32
  }
  func.func @transform_4(%arg0: i32, %arg1: i32, %arg2: i32) -> (i32, i32, i32, i32) {
    %c0_i32 = arith.constant 0 : i32
    %c0_i32_0 = arith.constant 0 : i32
    %c0_i32_1 = arith.constant 0 : i32
    return %arg0, %arg1, %c0_i32, %c0_i32_0 : i32, i32, i32, i32
  }
}

</mosaic_0001>

<llo_original>
// kernel: tpu_custom_call.1
$region0: #{tpu_custom_call.1}
  #allocation0 [shape = 'u32[]', space=smem, size = 0x4, offset = 0x4, fixed_abs, tag = 'smem constant byte address 0x4 - core index']
  #allocation1 [shape = 'u32[144,128]{1,0:T(1,128)}', space=vmem, size = 0x12000, scoped, tag = 'internal scratch']
  #allocation2 [shape = 'f32[6,8]{1,0:T(8,128)}', space=vmem, size = 0x1000, scoped, tag = 'scratch operand']
  %s0 = inlined_call_operand.vmem [shape: f32[2,4,256], index: 0, kind: input, shape index: {}]
  %s1 = inlined_call_operand.vmem [shape: f32[2,6,256], index: 1, kind: input, shape index: {}]
  %s2 = inlined_call_operand.vmem [shape: f32[8,4], index: 2, kind: input, shape index: {}]
  %s3 = inlined_call_operand.vmem [shape: f32[8,1], index: 3, kind: input, shape index: {}]
  %s4 = inlined_call_operand.vmem [shape: f32[2,1,6,8], index: 4, kind: output, shape index: {}]
  %s5 = sld [smem:[#allocation0]]
  $region57: #{tpu_custom_call.1} parent=0
    _
  %s7 = ssub.s32 1, %s5
  %s8 = scalar_select 0, %s7, %s5
  loop: start=0, step=1, limit=4
  $region2: #{tpu_custom_call.1} parent=0 // loop_pre_header
    _
  $region3: #{tpu_custom_call.1} parent=0 // loop_header
    %s10 = sphi 0, %s14
    %p11 = scmp.ge.s32.totalorder %s10, 4
    %s17 = sphi 0, %s36
    %s18 = sphi 0, %s32
    %s19 = sphi 0, %s28
    %s20 = sphi 0, %s17
    %s21 = sphi 0, %s18
    %s22 = sphi 0, %s19
    %s23 = sphi 0, %s20
    %s24 = sphi 0, %s21
    %s25 = sphi 0, %s22
    %s43 = sphi 0, %s45
    %s46 = sphi 0, %s43
    %s47 = sphi 0, %s46
    %s63 = sphi 0, %s47
    %s73 = sphi 0, %s75
    %s76 = sphi 0, %s73
    %s77 = sphi 0, %s76
    %s93 = sphi 0, %s77
    %s97 = sphi 0, %s97
    %s99 = sphi 0, %s97
    %s100 = sphi 0, %s99
    %s114 = sphi 0, %s100
    %s118 = sphi 0, %s118
    %s120 = sphi 0, %s118
    %s121 = sphi 0, %s120
    %s135 = sphi 0, %s121
    %s143 = sphi 0, %s145
    %s146 = sphi 0, %s143
    %s147 = sphi 0, %s146
    %s163 = sphi 0, %s147
  $region4: #{tpu_custom_call.1} parent=0 // loop_header_branch
    %13 = sbr.rel (%p11) target = $region8
  $region5: #{tpu_custom_call.1} parent=0 // loop_body
    %s15 = ssub.s32 %s10, 1
    %s16 = ssub.s32 %s10, 2
    %s26 = sadd.s32 1, %s19
    %p27 = scmp.ge.s32.totalorder %s26, 1
    %s28 = scalar_select %p27, 0, %s26
    %s29 = sadd.s32 1, %s18
    %s30 = scalar_select %p27, %s29, %s18
    %p31 = scmp.ge.s32.totalorder %s30, 1
    %s32 = scalar_select %p31, 0, %s30
    %s33 = sadd.s32 1, %s17
    %s34 = scalar_select %p31, %s33, %s17
    %p35 = scmp.ge.s32.totalorder %s34, 2
    %s36 = scalar_select %p35, 0, %s34
    %s37 = sadd.s32 %s18, %s19
    %s38 = sadd.s32 %s32, %s28
    %s39 = ssub.s32 %s17, %s36
    %s40 = ssub.s32 %s37, %s38
    %s41 = sor.u32 %s39, %s40
    %p42 = scmp.eq.s32.totalorder %s41, 0
    %s44 = sadd.s32 %s43, 1
    %s45 = scalar_select %p42, %s43, %s44
    %p48 = pneg %p42
    %p49 = scmp.eq.s32.totalorder %s10, 1
    %p50 = por %p48, %p49
    %p51 = scmp.ne.s32.totalorder %s43, %s46
    %p52 = scmp.eq.s32.totalorder %s10, 0
    %p53 = por %p51, %p52
    %p54 = scmp.ne.s32.totalorder %s43, %s46
    %p55 = scmp.eq.s32.totalorder %s15, 1
    %p56 = por %p54, %p55
    %p57 = scmp.ne.s32.totalorder %s46, %s47
    %p58 = scmp.eq.s32.totalorder %s15, 0
    %p59 = por %p57, %p58
    %p60 = scmp.ne.s32.totalorder %s46, %s47
    %p61 = scmp.eq.s32.totalorder %s16, 1
    %p62 = por %p60, %p61
    %p64 = scmp.ne.s32.totalorder %s47, %s63
    %p65 = scmp.eq.s32.totalorder %s16, 0
    %p66 = por %p64, %p65
    %s67 = sadd.s32 %s18, %s19
    %s68 = sadd.s32 %s32, %s28
    %s69 = ssub.s32 %s17, %s36
    %s70 = ssub.s32 %s67, %s68
    %s71 = sor.u32 %s69, %s70
    %p72 = scmp.eq.s32.totalorder %s71, 0
    %s74 = sadd.s32 %s73, 1
    %s75 = scalar_select %p72, %s73, %s74
    %p78 = pneg %p72
    %p79 = scmp.eq.s32.totalorder %s10, 1
    %p80 = por %p78, %p79
    %p81 = scmp.ne.s32.totalorder %s73, %s76
    %p82 = scmp.eq.s32.totalorder %s10, 0
    %p83 = por %p81, %p82
    %p84 = scmp.ne.s32.totalorder %s73, %s76
    %p85 = scmp.eq.s32.totalorder %s15, 1
    %p86 = por %p84, %p85
    %p87 = scmp.ne.s32.totalorder %s76, %s77
    %p88 = scmp.eq.s32.totalorder %s15, 0
    %p89 = por %p87, %p88
    %p90 = scmp.ne.s32.totalorder %s76, %s77
    %p91 = scmp.eq.s32.totalorder %s16, 1
    %p92 = por %p90, %p91
    %p94 = scmp.ne.s32.totalorder %s77, %s93
    %p95 = scmp.eq.s32.totalorder %s16, 0
    %p96 = por %p94, %p95
    %s98 = sadd.s32 %s97, 1
    %p101 = scmp.eq.s32.totalorder %s10, 1
    %p102 = scmp.ne.s32.totalorder %s97, %s99
    %p103 = scmp.eq.s32.totalorder %s10, 0
    %p104 = por %p102, %p103
    %p105 = scmp.ne.s32.totalorder %s97, %s99
    %p106 = scmp.eq.s32.totalorder %s15, 1
    %p107 = por %p105, %p106
    %p108 = scmp.ne.s32.totalorder %s99, %s100
    %p109 = scmp.eq.s32.totalorder %s15, 0
    %p110 = por %p108, %p109
    %p111 = scmp.ne.s32.totalorder %s99, %s100
    %p112 = scmp.eq.s32.totalorder %s16, 1
    %p113 = por %p111, %p112
    %p115 = scmp.ne.s32.totalorder %s100, %s114
    %p116 = scmp.eq.s32.totalorder %s16, 0
    %p117 = por %p115, %p116
    %s119 = sadd.s32 %s118, 1
    %p122 = scmp.eq.s32.totalorder %s10, 1
    %p123 = scmp.ne.s32.totalorder %s118, %s120
    %p124 = scmp.eq.s32.totalorder %s10, 0
    %p125 = por %p123, %p124
    %p126 = scmp.ne.s32.totalorder %s118, %s120
    %p127 = scmp.eq.s32.totalorder %s15, 1
    %p128 = por %p126, %p127
    %p129 = scmp.ne.s32.totalorder %s120, %s121
    %p130 = scmp.eq.s32.totalorder %s15, 0
    %p131 = por %p129, %p130
    %p132 = scmp.ne.s32.totalorder %s120, %s121
    %p133 = scmp.eq.s32.totalorder %s16, 1
    %p134 = por %p132, %p133
    %p136 = scmp.ne.s32.totalorder %s121, %s135
    %p137 = scmp.eq.s32.totalorder %s16, 0
    %p138 = por %p136, %p137
    %s139 = ssub.s32 %s17, %s36
    %s140 = ssub.s32 %s18, %s32
    %s141 = sor.u32 %s139, %s140
    %p142 = scmp.eq.s32.totalorder %s141, 0
    %s144 = sadd.s32 %s143, 1
    %s145 = scalar_select %p142, %s143, %s144
    %p148 = pneg %p142
    %p149 = scmp.eq.s32.totalorder %s10, 1
    %p150 = por %p148, %p149
    %p151 = scmp.ne.s32.totalorder %s143, %s146
    %p152 = scmp.eq.s32.totalorder %s10, 0
    %p153 = por %p151, %p152
    %p154 = scmp.ne.s32.totalorder %s143, %s146
    %p155 = scmp.eq.s32.totalorder %s15, 1
    %p156 = por %p154, %p155
    %p157 = scmp.ne.s32.totalorder %s146, %s147
    %p158 = scmp.eq.s32.totalorder %s15, 0
    %p159 = por %p157, %p158
    %p160 = scmp.ne.s32.totalorder %s146, %s147
    %p161 = scmp.eq.s32.totalorder %s16, 1
    %p162 = por %p160, %p161
    %p164 = scmp.ne.s32.totalorder %s147, %s163
    %p165 = scmp.eq.s32.totalorder %s16, 0
    %p166 = por %p164, %p165
    %p167 = scmp.le.s32.totalorder 1, %s10
    %p168 = scmp.lt.s32.totalorder %s10, 3
    %p169 = pnand %p167, %p168
    %p170 = pneg %p169
    // Predicated region
    $region9: #{tpu_custom_call.1} parent=5 // pred_check
      _
    $region10: #{tpu_custom_call.1} parent=5 // pred_check_branch
      %172 = sbr.rel (%p169) target = $region12
    $region11: #{tpu_custom_call.1} parent=5 // pred_region
      %s173 = ssub.s32 %s10, 1
      // Predicated region
      $region13: #{tpu_custom_call.1} parent=11 // pred_check
        %p174 = pneg %p110
      $region14: #{tpu_custom_call.1} parent=11 // pred_check_branch
        %176 = sbr.rel (%p174) target = $region16
      $region15: #{tpu_custom_call.1} parent=11 // pred_region
        _
      $region16: #{tpu_custom_call.1} parent=11 // pred_fallthru
        _
      // Predicated region
      $region17: #{tpu_custom_call.1} parent=11 // pred_check
        %p177 = pneg %p131
      $region18: #{tpu_custom_call.1} parent=11 // pred_check_branch
        %179 = sbr.rel (%p177) target = $region20
      $region19: #{tpu_custom_call.1} parent=11 // pred_region
        _
      $region20: #{tpu_custom_call.1} parent=11 // pred_fallthru
        _
    $region12: #{tpu_custom_call.1} parent=5 // pred_fallthru
      _
    %p180 = scmp.lt.s32.totalorder %s10, 2
    // Predicated region
    $region21: #{tpu_custom_call.1} parent=5 // pred_check
      %p181 = pneg %p180
    $region22: #{tpu_custom_call.1} parent=5 // pred_check_branch
      %183 = sbr.rel (%p181) target = $region24
    $region23: #{tpu_custom_call.1} parent=5 // pred_region
      // Predicated region
      $region25: #{tpu_custom_call.1} parent=23 // pred_check
        %p184 = pneg %p53
      $region26: #{tpu_custom_call.1} parent=23 // pred_check_branch
        %186 = sbr.rel (%p184) target = $region28
      $region27: #{tpu_custom_call.1} parent=23 // pred_region
        %s187 = sadd.s32 %s18, %s19
        %s188 = smul.u32 2, %s187
        %p189 = scmp.lt.s32.totalorder %s17, 1
        %s190 = scalar_select %p189, %s17, 1
        %p191 = scmp.lt.s32.totalorder %s188, 1
        %s192 = scalar_select %p191, %s188, 1
        %s193 = smul.addr %s190, 2
        %s194 = sadd.s32 %s192, %s193
        %s195 = smul.addr %s194, 4
        %s196 = scalar_lea.vmem %s0, %s195
        %s197 = sadd.s32 %s18, %s19
        %s198 = smul.u32 2, %s197
      $region28: #{tpu_custom_call.1} parent=23 // pred_fallthru
        _
      // Predicated region
      $region29: #{tpu_custom_call.1} parent=23 // pred_check
        %p199 = pneg %p83
      $region30: #{tpu_custom_call.1} parent=23 // pred_check_branch
        %201 = sbr.rel (%p199) target = $region32
      $region31: #{tpu_custom_call.1} parent=23 // pred_region
        %s202 = sadd.s32 %s18, %s19
        %s203 = smul.u32 2, %s202
        %p204 = scmp.lt.s32.totalorder %s17, 1
        %s205 = scalar_select %p204, %s17, 1
        %p206 = scmp.lt.s32.totalorder %s203, 1
        %s207 = scalar_select %p206, %s203, 1
        %s208 = smul.addr %s205, 2
        %s209 = sadd.s32 %s207, %s208
        %s210 = smul.addr %s209, 8
        %s211 = scalar_lea.vmem %s1, %s210
        %s212 = sadd.s32 %s18, %s19
        %s213 = smul.u32 2, %s212
      $region32: #{tpu_custom_call.1} parent=23 // pred_fallthru
        _
    $region24: #{tpu_custom_call.1} parent=5 // pred_fallthru
      _
    %p214 = scmp.le.s32.totalorder 1, %s10
    %p215 = scmp.lt.s32.totalorder %s10, 3
    %p216 = pnand %p214, %p215
    %p217 = pneg %p216
    // Predicated region
    $region33: #{tpu_custom_call.1} parent=5 // pred_check
      _
    $region34: #{tpu_custom_call.1} parent=5 // pred_check_branch
      %219 = sbr.rel (%p216) target = $region36
    $region35: #{tpu_custom_call.1} parent=5 // pred_region
      %s220 = ssub.s32 %s10, 1
      %s221 = sadd.s32 %s21, %s22
      %s222 = smul.u32 2, %s221
      %p223 = scmp.lt.s32.totalorder %s20, 1
      %s224 = scalar_select %p223, %s20, 1
      %p225 = scmp.lt.s32.totalorder %s222, 1
      %s226 = scalar_select %p225, %s222, 1
      %s227 = smul.addr %s224, 2
      %s228 = sadd.s32 %s226, %s227
      %s229 = smul.addr %s228, 4
      %s230 = scalar_lea.vmem %s0, %s229
      %p231 = pneg %p59
      %p232 = pneg %p56
      %s233 = sadd.s32 %s21, %s22
      %s234 = smul.u32 2, %s233
      %p235 = scmp.lt.s32.totalorder %s20, 1
      %s236 = scalar_select %p235, %s20, 1
      %p237 = scmp.lt.s32.totalorder %s234, 1
      %s238 = scalar_select %p237, %s234, 1
      %s239 = smul.addr %s236, 2
      %s240 = sadd.s32 %s238, %s239
      %s241 = smul.addr %s240, 8
      %s242 = scalar_lea.vmem %s1, %s241
      %p243 = pneg %p89
      %p244 = pneg %p86
      %p245 = pneg %p110
      %p246 = pneg %p107
      %p247 = pneg %p131
      %p248 = pneg %p128
      %p249 = pneg %p159
      %p250 = pneg %p156
      %p251 = scmp.lt.s32.totalorder %s20, 1
      %s252 = scalar_select %p251, %s20, 1
      %p253 = scmp.lt.s32.totalorder %s21, 0
      %s254 = scalar_select %p253, %s21, 0
      %s255 = sadd.s32 %s254, %s252
      %s256 = smul.addr %s255, 8
      %s257 = scalar_lea.vmem %s4, %s256
      %s258 = sadd.s32 %s21, %s22
      %s259 = smul.u32 2, %s258
      %p260 = scmp.lt.s32.totalorder %s20, 1
      %s261 = scalar_select %p260, %s20, 1
      %p262 = scmp.lt.s32.totalorder %s259, 1
      %s263 = scalar_select %p262, %s259, 1
      %s264 = smul.addr %s261, 2
      %s265 = sadd.s32 %s263, %s264
      %s266 = smul.addr %s265, 4
      %s267 = scalar_lea.vmem %s0, %s266
      %s268 = sadd.s32 %s21, %s22
      %s269 = smul.u32 2, %s268
      %s270 = sadd.s32 %s21, %s22
      %s271 = smul.u32 2, %s270
      %p272 = scmp.lt.s32.totalorder %s20, 1
      %s273 = scalar_select %p272, %s20, 1
      %p274 = scmp.lt.s32.totalorder %s271, 1
      %s275 = scalar_select %p274, %s271, 1
      %s276 = smul.addr %s273, 2
      %s277 = sadd.s32 %s275, %s276
      %s278 = smul.addr %s277, 8
      %s279 = scalar_lea.vmem %s1, %s278
      %s280 = sadd.s32 %s21, %s22
      %s281 = smul.u32 2, %s280
      %p282 = scmp.lt.s32.totalorder %s20, 1
      %s283 = scalar_select %p282, %s20, 1
      %p284 = scmp.lt.s32.totalorder %s21, 0
      %s285 = scalar_select %p284, %s21, 0
      %s286 = sadd.s32 %s285, %s283
      %s287 = smul.addr %s286, 8
      %s288 = scalar_lea.vmem %s4, %s287
      %p289 = scmp.eq.s32.totalorder %s22, 0
      // Predicated region
      $region37: #{tpu_custom_call.1} parent=35 // pred_check
        %p290 = pneg %p289
      $region38: #{tpu_custom_call.1} parent=35 // pred_check_branch
        %292 = sbr.rel (%p290) target = $region40
      $region39: #{tpu_custom_call.1} parent=35 // pred_region
        %vm293 = vcmask 62464
        %294 = vst.msk [vmem:[#allocation2] sm:$0x3f] %vm293, 0.0
      $region40: #{tpu_custom_call.1} parent=35 // pred_fallthru
        _
      %v295 = vld [vmem:[%s267] sm:$0xff]
      %v296 = vld [vmem:[%s279] sm:$0x3f]
      %v297 = vld [vmem:[%s279 + $0x8] sm:$0x3f]
      %v298 = vld [vmem:[%s2] sm:$0xff]
      %v299 = vld [vmem:[%s3] sm:$0xff]
      %301 = vset.pattern.permute.xlu0 0
      %302 = vperm.xlu0 %301, %v299
      %v303 = vpop.permute.xlu0 %302
      %v306 = vcombine.high %v295, %v295
      %vm307 = vcmask 31744
      %v309 = vsel %vm307, %v298, 0
      %vm311 = vcmask 1043456
      %v312 = vsel %vm311, %v295, 0
      %v314 = vsel %vm311, %v306, 0
      %316 = vmatprep.subr.mxu0 %v314
      %317 = vmatpush1.msra.mxu0 %v312
      %318 = vmatprep.subr.mxu0 0.0
      %319 = vmatpush1.msra.mxu0 0.0
      %320 = vmatprep.subr.mxu0 0.0
      %321 = vmatpush1.msra.mxu0 0.0
      %322 = vmatprep.subr.mxu0 0.0
      %323 = vmatpush1.msra.mxu0 0.0
      %324 = vmatprep.subr.mxu0 0.0
      %325 = vmatpush1.msra.mxu0 0.0
      %326 = vmatprep.subr.mxu0 0.0
      %327 = vmatpush1.msra.mxu0 0.0
      %328 = vmatprep.subr.mxu0 0.0
      %329 = vmatpush1.msra.mxu0 0.0
      %330 = vmatprep.subr.mxu0 0.0
      %331 = vmatpush1.msra.mxu0 0.0
      %332 = vmatprep.subr.mxu0 0.0
      %333 = vmatpush1.msra.mxu0 0.0
      %334 = vmatprep.subr.mxu0 0.0
      %335 = vmatpush1.msra.mxu0 0.0
      %336 = vmatprep.subr.mxu0 0.0
      %337 = vmatpush1.msra.mxu0 0.0
      %338 = vmatprep.subr.mxu0 0.0
      %339 = vmatpush1.msra.mxu0 0.0
      %340 = vmatprep.subr.mxu0 0.0
      %341 = vmatpush1.msra.mxu0 0.0
      %342 = vmatprep.subr.mxu0 0.0
      %343 = vmatpush1.msra.mxu0 0.0
      %344 = vmatprep.subr.mxu0 0.0
      %345 = vmatpush1.msra.mxu0 0.0
      %346 = vmatprep.subr.mxu0 0.0
      %347 = vmatpush1.msra.mxu0 0.0
      %348 = vmatprep.subr.mxu0 0.0
      %349 = vmatpush1.msra.mxu0 0.0
      %350 = vmatprep.subr.mxu0 0.0
      %351 = vmatpush1.msra.mxu0 0.0
      %352 = vmatprep.subr.mxu0 0.0
      %353 = vmatpush1.msra.mxu0 0.0
      %354 = vmatprep.subr.mxu0 0.0
      %355 = vmatpush1.msra.mxu0 0.0
      %356 = vmatprep.subr.mxu0 0.0
      %357 = vmatpush1.msra.mxu0 0.0
      %358 = vmatprep.subr.mxu0 0.0
      %359 = vmatpush1.msra.mxu0 0.0
      %360 = vmatprep.subr.mxu0 0.0
      %361 = vmatpush1.msra.mxu0 0.0
      %362 = vmatprep.subr.mxu0 0.0
      %363 = vmatpush1.msra.mxu0 0.0
      %364 = vmatprep.subr.mxu0 0.0
      %365 = vmatpush1.msra.mxu0 0.0
      %366 = vmatprep.subr.mxu0 0.0
      %367 = vmatpush1.msra.mxu0 0.0
      %368 = vmatprep.subr.mxu0 0.0
      %369 = vmatpush1.msra.mxu0 0.0
      %370 = vmatprep.subr.mxu0 0.0
      %371 = vmatpush1.msra.mxu0 0.0
      %372 = vmatprep.subr.mxu0 0.0
      %373 = vmatpush1.msra.mxu0 0.0
      %374 = vmatprep.subr.mxu0 0.0
      %375 = vmatpush1.msra.mxu0 0.0
      %376 = vmatprep.subr.mxu0 0.0
      %377 = vmatpush1.msra.mxu0 0.0
      %378 = vmatprep.subr.mxu0 0.0
      %379 = vmatpush1.msra.mxu0 0.0
      %380 = vmatprep.mubr.f32.mxu0 0.0
      %381 = vmatmul.mubr.f32.gmra.mrb[0].mxu0 %v309
      %v382 = vpop.f32.mrb[0].mxu0
      %v383 = vadd.f32 %v303, %v382
      %v384 = vpop.f32.mrb[0].mxu0
      %v385 = vadd.f32 %v303, %v384
      %386 = vdwg.mxu0
      %v387 = vmax.f32 %v383, 0.0
      %v388 = vmax.f32 %v385, 0.0
      %v389 = vld [vmem:[#allocation2] sm:$0x3f]
      %390 = vmatprep.subr.mxu0 %v388
      %391 = vmatpush1.xpose.msra.mxu0 %v387
      %392 = vmatprep.subr.mxu0 0.0
      %393 = vmatpush1.xpose.msra.mxu0 0.0
      %394 = vmatprep.subr.mxu0 0.0
      %395 = vmatpush1.xpose.msra.mxu0 0.0
      %396 = vmatprep.subr.mxu0 0.0
      %397 = vmatpush1.xpose.msra.mxu0 0.0
      %398 = vmatprep.subr.mxu0 0.0
      %399 = vmatpush1.xpose.msra.mxu0 0.0
      %400 = vmatprep.subr.mxu0 0.0
      %401 = vmatpush1.xpose.msra.mxu0 0.0
      %402 = vmatprep.subr.mxu0 0.0
      %403 = vmatpush1.xpose.msra.mxu0 0.0
      %404 = vmatprep.subr.mxu0 0.0
      %405 = vmatpush1.xpose.msra.mxu0 0.0
      %406 = vmatprep.subr.mxu0 0.0
      %407 = vmatpush1.xpose.msra.mxu0 0.0
      %408 = vmatprep.subr.mxu0 0.0
      %409 = vmatpush1.xpose.msra.mxu0 0.0
      %410 = vmatprep.subr.mxu0 0.0
      %411 = vmatpush1.xpose.msra.mxu0 0.0
      %412 = vmatprep.subr.mxu0 0.0
      %413 = vmatpush1.xpose.msra.mxu0 0.0
      %414 = vmatprep.subr.mxu0 0.0
      %415 = vmatpush1.xpose.msra.mxu0 0.0
      %416 = vmatprep.subr.mxu0 0.0
      %417 = vmatpush1.xpose.msra.mxu0 0.0
      %418 = vmatprep.subr.mxu0 0.0
      %419 = vmatpush1.xpose.msra.mxu0 0.0
      %420 = vmatprep.subr.mxu0 0.0
      %421 = vmatpush1.xpose.msra.mxu0 0.0
      %422 = vmatprep.subr.mxu0 0.0
      %423 = vmatpush1.xpose.msra.mxu0 0.0
      %424 = vmatprep.subr.mxu0 0.0
      %425 = vmatpush1.xpose.msra.mxu0 0.0
      %426 = vmatprep.subr.mxu0 0.0
      %427 = vmatpush1.xpose.msra.mxu0 0.0
      %428 = vmatprep.subr.mxu0 0.0
      %429 = vmatpush1.xpose.msra.mxu0 0.0
      %430 = vmatprep.subr.mxu0 0.0
      %431 = vmatpush1.xpose.msra.mxu0 0.0
      %432 = vmatprep.subr.mxu0 0.0
      %433 = vmatpush1.xpose.msra.mxu0 0.0
      %434 = vmatprep.subr.mxu0 0.0
      %435 = vmatpush1.xpose.msra.mxu0 0.0
      %436 = vmatprep.subr.mxu0 0.0
      %437 = vmatpush1.xpose.msra.mxu0 0.0
      %438 = vmatprep.subr.mxu0 0.0
      %439 = vmatpush1.xpose.msra.mxu0 0.0
      %440 = vmatprep.subr.mxu0 0.0
      %441 = vmatpush1.xpose.msra.mxu0 0.0
      %442 = vmatprep.subr.mxu0 0.0
      %443 = vmatpush1.xpose.msra.mxu0 0.0
      %444 = vmatprep.subr.mxu0 0.0
      %445 = vmatpush1.xpose.msra.mxu0 0.0
      %446 = vmatprep.subr.mxu0 0.0
      %447 = vmatpush1.xpose.msra.mxu0 0.0
      %448 = vmatprep.subr.mxu0 0.0
      %449 = vmatpush1.xpose.msra.mxu0 0.0
      %450 = vmatprep.subr.mxu0 0.0
      %451 = vmatpush1.xpose.msra.mxu0 0.0
      %452 = vmatprep.subr.mxu0 0.0
      %453 = vmatpush1.xpose.msra.mxu0 0.0
      %454 = vmatprep.mubr.f32.mxu0 %v297
      %455 = vmatmul.mubr.f32.gmra.mrb[0].mxu0 %v296
      %v456 = vpop.f32.mrb[0].mxu0
      %v457 = vadd.f32 0.0, %v456
      %v458 = vpop.f32.mrb[0].mxu0
      %459 = vdwg.mxu0
      %v460 = vadd.f32 %v389, %v457
      %vm461 = vcmask 62464
      %462 = vst.msk [vmem:[#allocation2] sm:$0x3f] %vm461, %v460
      // Predicated region
      $region41: #{tpu_custom_call.1} parent=35 // pred_check
        %p463 = pneg %p289
      $region42: #{tpu_custom_call.1} parent=35 // pred_check_branch
        %465 = sbr.rel (%p463) target = $region44
      $region43: #{tpu_custom_call.1} parent=35 // pred_region
        %v466 = vld [vmem:[#allocation2] sm:$0x3f]
        %467 = vst.msk [vmem:[%s288] sm:$0x3f] %vm461, %v466
      $region44: #{tpu_custom_call.1} parent=35 // pred_fallthru
        _
      %p468 = scmp.lt.s32.totalorder %s20, 1
      %s469 = scalar_select %p468, %s20, 1
      %p470 = scmp.lt.s32.totalorder %s21, 0
      %s471 = scalar_select %p470, %s21, 0
      %s472 = sadd.s32 %s471, %s469
      %s473 = smul.addr %s472, 8
      %s474 = scalar_lea.vmem %s4, %s473
      // Predicated region
      $region45: #{tpu_custom_call.1} parent=35 // pred_check
        %p475 = pneg %p156
      $region46: #{tpu_custom_call.1} parent=35 // pred_check_branch
        %477 = sbr.rel (%p475) target = $region48
      $region47: #{tpu_custom_call.1} parent=35 // pred_region
        _
      $region48: #{tpu_custom_call.1} parent=35 // pred_fallthru
        _
    $region36: #{tpu_custom_call.1} parent=5 // pred_fallthru
      _
    %p478 = scmp.le.s32.totalorder 2, %s10
    // Predicated region
    $region49: #{tpu_custom_call.1} parent=5 // pred_check
      %p479 = pneg %p478
    $region50: #{tpu_custom_call.1} parent=5 // pred_check_branch
      %481 = sbr.rel (%p479) target = $region52
    $region51: #{tpu_custom_call.1} parent=5 // pred_region
      %s482 = ssub.s32 %s10, 2
      // Predicated region
      $region53: #{tpu_custom_call.1} parent=51 // pred_check
        %p483 = pneg %p162
      $region54: #{tpu_custom_call.1} parent=51 // pred_check_branch
        %485 = sbr.rel (%p483) target = $region56
      $region55: #{tpu_custom_call.1} parent=51 // pred_region
        %p486 = scmp.lt.s32.totalorder %s23, 1
        %s487 = scalar_select %p486, %s23, 1
        %p488 = scmp.lt.s32.totalorder %s24, 0
        %s489 = scalar_select %p488, %s24, 0
        %s490 = sadd.s32 %s489, %s487
        %s491 = smul.addr %s490, 8
        %s492 = scalar_lea.vmem %s4, %s491
      $region56: #{tpu_custom_call.1} parent=51 // pred_fallthru
        _
    $region52: #{tpu_custom_call.1} parent=5 // pred_fallthru
      _
  $region6: #{tpu_custom_call.1} parent=0 // loop_footer
    %s14 = sadd.s32 1, %s10
  $region7: #{tpu_custom_call.1} parent=0 // loop_footer_branch
    %9 = sbr.rel target = $region3
  $region8: #{tpu_custom_call.1} parent=0 // loop_exit
    _

</llo_original>
